<compile_context>
chip_gen: v7x
topology: tpu7x:2x2x1
jax: 0.10.0
libtpu: 0.0.40
codegen_flags: <defaults>
</compile_context>

<pallas_src>
import jax
import jax.numpy as jnp
from jax.experimental import pallas as pl
from jax.experimental.pallas import tpu as pltpu


def _round_up(x, m):
    return ((x + m - 1) // m) * m


def _largest_dividing_tile(total, max_tile):
    """Largest multiple of 128 that divides `total` and is <= max_tile (or None)."""
    t = (min(int(max_tile), int(total)) // 128) * 128
    while t >= 128:
        if total % t == 0:
            return t
        t -= 128
    return None


def _physical_vmem_bytes():
    # v5e/v6e: 128 MiB per TensorCore, v7x: 64 MiB.  Fall back conservatively.
    try:
        return int(pltpu.get_tpu_info().vmem_capacity_bytes)
    except Exception:
        return 64 * 1024 * 1024


def _mlp_kernel(x_ref, wg_ref, wu_ref, w2_ref, o_ref, acc_ref):
    # x_ref:   (tm, H)   token tile (resident across the reduction axis)
    # wg_ref:  (H, ti)   gate-projection column tile
    # wu_ref:  (H, ti)   up-projection column tile
    # w2_ref:  (ti, H)   down-projection row tile
    # o_ref:   (tm, H)   output tile (resident across the reduction axis)
    # acc_ref: (tm, H)   f32 accumulator scratch
    ki = pl.program_id(1)

    @pl.when(ki == 0)
    def _init():
        acc_ref[...] = jnp.zeros_like(acc_ref)

    x = x_ref[...]
    # Two column-tile matmuls on the MXU; operands stay in storage dtype,
    # accumulation in f32.
    gate = jnp.dot(x, wg_ref[...], preferred_element_type=jnp.float32)
    up = jnp.dot(x, wu_ref[...], preferred_element_type=jnp.float32)

    # SiluAndMul epilogue in f32 (VPU + EUP).
    h = (gate * jax.nn.sigmoid(gate)) * up

    # Down projection of this intermediate tile, accumulated into VMEM f32.
    acc_ref[...] += jnp.dot(h.astype(w2_ref.dtype), w2_ref[...],
                            preferred_element_type=jnp.float32)

    @pl.when(ki == pl.num_programs(1) - 1)
    def _finalize():
        o_ref[...] = acc_ref[...].astype(o_ref.dtype)


def internlm2_mlp(x, w_gate_up, w2, *, token_tile=512, inter_tile=512):
    """x: [..., H]; w_gate_up: [H, 2*I] (gate cols first, then up); w2: [I, H]."""
    orig_shape = x.shape
    H = orig_shape[-1]
    x2 = x.reshape(-1, H)
    T = x2.shape[0]

    H2, two_I = w_gate_up.shape
    I, H3 = w2.shape
    assert H == H2 == H3 and two_I == 2 * I

    x_b = jnp.dtype(x.dtype).itemsize
    w_b = jnp.dtype(w_gate_up.dtype).itemsize
    w2_b = jnp.dtype(w2.dtype).itemsize

    # ---- token tile --------------------------------------------------------
    tm = min(int(token_tile), _round_up(T, 8))
    tm = _round_up(tm, 8)

    # ---- intermediate tile -------------------------------------------------
    # Fast path: ti is a lane-aligned divisor of I -> gate/up column tiles are
    # read directly out of the merged weight (no per-call slicing/padding).
    ti = _largest_dividing_tile(I, inter_tile)
    merged_fast_path = ti is not None
    if not merged_fast_path:
        ti = min(_round_up(int(inter_tile), 128), _round_up(I, 128))

    # ---- VMEM budget -> clamp tile sizes -----------------------------------
    def vmem_need(tm_, ti_):
        return (2 * tm_ * H * x_b          # x tile (double-buffered)
                + 2 * 2 * H * ti_ * w_b    # gate + up weight tiles
                + 2 * ti_ * H * w2_b       # w2 tile
                + 2 * tm_ * H * x_b        # output tile
                + tm_ * H * 4)             # f32 accumulator

    phys_vmem = _physical_vmem_bytes()
    vmem_cap = max(32 * 1024 * 1024, int(phys_vmem * 0.75))

    while int(vmem_need(tm, ti) * 1.15) > vmem_cap:
        new_ti = None
        if ti > 128:
            if merged_fast_path:
                new_ti = _largest_dividing_tile(I, ti // 2)
            else:
                new_ti = max(128, (ti // 128 // 2) * 128)
        if new_ti is not None and new_ti < ti:
            ti = new_ti
            continue
        if tm > 64:
            new_tm = max(64, _round_up(tm // 2, 8))
            if new_tm < tm:
                tm = new_tm
                continue
        break

    # ---- operands & specs ---------------------------------------------------
    T_pad = _round_up(T, tm)
    if T_pad != T:
        x2 = jnp.pad(x2, ((0, T_pad - T), (0, 0)))

    if merged_fast_path:
        num_k = I // ti
        wg_operand = w_gate_up          # same HBM array, two windows
        wu_operand = w_gate_up
        w2_operand = w2
        gate_spec = pl.BlockSpec((H, ti), lambda i, k: (0, k))
        up_spec = pl.BlockSpec((H, ti), lambda i, k: (0, k + num_k))
    else:
        # Fallback (I has no lane-aligned divisor): slice + zero-pad per call.
        # Padded columns give silu(0)*0 == 0 -> no contribution to the output.
        I_pad = _round_up(I, ti)
        num_k = I_pad // ti
        wg_operand = jnp.pad(w_gate_up[:, :I], ((0, 0), (0, I_pad - I)))
        wu_operand = jnp.pad(w_gate_up[:, I:], ((0, 0), (0, I_pad - I)))
        w2_operand = jnp.pad(w2, ((0, I_pad - I), (0, 0)))
        gate_spec = pl.BlockSpec((H, ti), lambda i, k: (0, k))
        up_spec = pl.BlockSpec((H, ti), lambda i, k: (0, k))

    grid = (T_pad // tm, num_k)

    vmem_limit = int(min(max(int(vmem_need(tm, ti) * 1.15), 32 * 1024 * 1024),
                         vmem_cap))

    out_bytes = T_pad * H * x_b
    cost = pl.CostEstimate(
        flops=2 * T * H * (2 * I) + 2 * T * I * H,
        transcendentals=T * I,
        # Weights are re-streamed once per token-tile row.
        bytes_accessed=((T_pad // tm) * (w_gate_up.nbytes + w2.nbytes)
                        + x2.nbytes + out_bytes),
    )

    out = pl.pallas_call(
        _mlp_kernel,
        out_shape=jax.ShapeDtypeStruct((T_pad, H), x.dtype),
        grid_spec=pltpu.PrefetchScalarGridSpec(
            num_scalar_prefetch=0,
            grid=grid,
            in_specs=[
                pl.BlockSpec((tm, H), lambda i, k: (i, 0)),   # x token tile
                gate_spec,                                    # gate cols
                up_spec,                                      # up cols
                pl.BlockSpec((ti, H), lambda i, k: (k, 0)),   # w2 rows
            ],
            out_specs=pl.BlockSpec((tm, H), lambda i, k: (i, 0)),
            scratch_shapes=[pltpu.VMEM((tm, H), jnp.float32)],
        ),
        compiler_params=pltpu.CompilerParams(
            dimension_semantics=("parallel", "arbitrary"),
            vmem_limit_bytes=vmem_limit,
        ),
        cost_estimate=cost,
    )(x2, wg_operand, wu_operand, w2_operand)

    out = out[:T]
    return out.reshape(orig_shape[:-1] + (H,))


def reference_mlp(x, w_gate_up, w2):
    gate_up = x.astype(jnp.float32) @ w_gate_up.astype(jnp.float32)
    inter = w_gate_up.shape[1] // 2
    gate, up = gate_up[:, :inter], gate_up[:, inter:]
    h = jax.nn.silu(gate) * up
    return (h @ w2.astype(jnp.float32)).astype(x.dtype)


if __name__ == "__main__":
    hidden_size = 128        # lane-aligned output -> unmasked stores
    intermediate_size = 256
    seq = 40                 # not a multiple of the token tile -> exercises padding

    key = jax.random.PRNGKey(0)
    kx, kg, kw2 = jax.random.split(key, 3)

    x = jax.random.normal(kx, (seq, hidden_size), dtype=jnp.float32)
    w_gate_up = jax.random.normal(
        kg, (hidden_size, 2 * intermediate_size), dtype=jnp.float32) * 0.05
    w2 = jax.random.normal(
        kw2, (intermediate_size, hidden_size), dtype=jnp.float32) * 0.05

    # Small tiles so the test runs a 3x2 grid (parallel token axis + streaming
    # reduction over the intermediate axis) through the merged-weight fast
    # path.  Production defaults: token_tile=512, inter_tile=512 (clamped per
    # device by the VMEM budget).
    out = internlm2_mlp(x, w_gate_up, w2, token_tile=16, inter_tile=128)
    out = jax.block_until_ready(out)

    ref = reference_mlp(x, w_gate_up, w2)
    assert out.shape == (seq, hidden_size)
    assert jnp.allclose(out, ref, atol=2e-4, rtol=2e-4), "mismatch vs reference"

    print("KERNEL_OK")
</pallas_src>

<mosaic_0001>
module attributes {stable_mosaic.version = 11 : i64} {
  func.func @_mlp_kernel(%arg0: i32, %arg1: i32, %arg2: memref<16x128xf32, #tpu.memory_space<vmem>>, %arg3: memref<128x128xf32, #tpu.memory_space<vmem>>, %arg4: memref<128x128xf32, #tpu.memory_space<vmem>>, %arg5: memref<128x128xf32, #tpu.memory_space<vmem>>, %arg6: memref<16x128xf32, #tpu.memory_space<vmem>>, %arg7: memref<16x128xf32, #tpu.memory_space<vmem>>) attributes {dimension_semantics = [#tpu.dimension_semantics<parallel>, #tpu.dimension_semantics<arbitrary>], iteration_bounds = array<i64: 3, 2>, scalar_prefetch = 0 : i64, scratch_operands = 1 : i64, tpu.core_type = #tpu.core_type<tc>, window_params = [{transform_indices = @transform_0, window_bounds = array<i64: 16, 128>}, {transform_indices = @transform_1, window_bounds = array<i64: 128, 128>}, {transform_indices = @transform_2, window_bounds = array<i64: 128, 128>}, {transform_indices = @transform_3, window_bounds = array<i64: 128, 128>}, {transform_indices = @transform_4, window_bounds = array<i64: 16, 128>}]} {
    %c0_i32 = arith.constant 0 : i32
    %0 = arith.cmpi eq, %arg1, %c0_i32 : i32
    %1 = arith.extui %0 : i1 to i32
    %c0_i32_0 = arith.constant 0 : i32
    %2 = arith.cmpi ne, %1, %c0_i32_0 : i32
    scf.if %2 {
      %cst_16 = arith.constant 0.000000e+00 : f32
      %23 = vector.broadcast %cst_16 : f32 to vector<16x128xf32>
      %c0_17 = arith.constant 0 : index
      %c0_18 = arith.constant 0 : index
      %24 = vector.load %arg7[%c0_17, %c0_18] : memref<16x128xf32, #tpu.memory_space<vmem>>, vector<16x128xf32>
      tpu.vector_store %arg7[%c0_17, %c0_18], %23 {strides = array<i32>} : memref<16x128xf32, #tpu.memory_space<vmem>>, vector<16x128xf32>,
    } else {
    }
    %c0 = arith.constant 0 : index
    %c0_1 = arith.constant 0 : index
    %3 = vector.load %arg2[%c0, %c0_1] : memref<16x128xf32, #tpu.memory_space<vmem>>, vector<16x128xf32>
    %c0_2 = arith.constant 0 : index
    %c0_3 = arith.constant 0 : index
    %4 = vector.load %arg3[%c0_2, %c0_3] : memref<128x128xf32, #tpu.memory_space<vmem>>, vector<128x128xf32>
    %cst = arith.constant dense<0.000000e+00> : vector<16x128xf32>
    %5 = tpu.matmul %3, %4, %cst {dimension_numbers = #tpu.dot_dimension_numbers<[1], [0], [0], [1], [0, 0, 1, 1], [], []>} : vector<16x128xf32>, vector<128x128xf32>, vector<16x128xf32> -> vector<16x128xf32>
    %c0_4 = arith.constant 0 : index
    %c0_5 = arith.constant 0 : index
    %6 = vector.load %arg4[%c0_4, %c0_5] : memref<128x128xf32, #tpu.memory_space<vmem>>, vector<128x128xf32>
    %cst_6 = arith.constant dense<0.000000e+00> : vector<16x128xf32>
    %7 = tpu.matmul %3, %6, %cst_6 {dimension_numbers = #tpu.dot_dimension_numbers<[1], [0], [0], [1], [0, 0, 1, 1], [], []>} : vector<16x128xf32>, vector<128x128xf32>, vector<16x128xf32> -> vector<16x128xf32>
    %8 = arith.negf %5 : vector<16x128xf32>
    %9 = math.exp %8 : vector<16x128xf32>
    %cst_7 = arith.constant 1.000000e+00 : f32
    %10 = vector.broadcast %cst_7 : f32 to vector<16x128xf32>
    %11 = arith.addf %10, %9 : vector<16x128xf32>
    %12 = arith.divf %10, %11 : vector<16x128xf32>
    %13 = arith.mulf %5, %12 : vector<16x128xf32>
    %14 = arith.mulf %13, %7 : vector<16x128xf32>
    %c0_8 = arith.constant 0 : index
    %c0_9 = arith.constant 0 : index
    %15 = vector.load %arg7[%c0_8, %c0_9] : memref<16x128xf32, #tpu.memory_space<vmem>>, vector<16x128xf32>
    %c0_10 = arith.constant 0 : index
    %c0_11 = arith.constant 0 : index
    %16 = vector.load %arg5[%c0_10, %c0_11] : memref<128x128xf32, #tpu.memory_space<vmem>>, vector<128x128xf32>
    %cst_12 = arith.constant dense<0.000000e+00> : vector<16x128xf32>
    %17 = tpu.matmul %14, %16, %cst_12 {dimension_numbers = #tpu.dot_dimension_numbers<[1], [0], [0], [1], [0, 0, 1, 1], [], []>} : vector<16x128xf32>, vector<128x128xf32>, vector<16x128xf32> -> vector<16x128xf32>
    %18 = arith.addf %15, %17 : vector<16x128xf32>
    %c0_13 = arith.constant 0 : index
    %c0_14 = arith.constant 0 : index
    %19 = vector.load %arg7[%c0_13, %c0_14] : memref<16x128xf32, #tpu.memory_space<vmem>>, vector<16x128xf32>
    tpu.vector_store %arg7[%c0_13, %c0_14], %18 {strides = array<i32>} : memref<16x128xf32, #tpu.memory_space<vmem>>, vector<16x128xf32>,
    %c1_i32 = arith.constant 1 : i32
    %20 = arith.cmpi eq, %arg1, %c1_i32 : i32
    %21 = arith.extui %20 : i1 to i32
    %c0_i32_15 = arith.constant 0 : i32
    %22 = arith.cmpi ne, %21, %c0_i32_15 : i32
    scf.if %22 {
      %c0_16 = arith.constant 0 : index
      %c0_17 = arith.constant 0 : index
      %23 = vector.load %arg7[%c0_16, %c0_17] : memref<16x128xf32, #tpu.memory_space<vmem>>, vector<16x128xf32>
      %c0_18 = arith.constant 0 : index
      %c0_19 = arith.constant 0 : index
      %24 = vector.load %arg6[%c0_18, %c0_19] : memref<16x128xf32, #tpu.memory_space<vmem>>, vector<16x128xf32>
      tpu.vector_store %arg6[%c0_18, %c0_19], %23 {strides = array<i32>} : memref<16x128xf32, #tpu.memory_space<vmem>>, vector<16x128xf32>,
    } else {
    }
    return
  }
  func.func @transform_0(%arg0: i32, %arg1: i32) -> (i32, i32) {
    %c0_i32 = arith.constant 0 : i32
    %c0_i32_0 = arith.constant 0 : i32
    return %arg0, %c0_i32 : i32, i32
  }
  func.func @transform_1(%arg0: i32, %arg1: i32) -> (i32, i32) {
    %c0_i32 = arith.constant 0 : i32
    %c0_i32_0 = arith.constant 0 : i32
    return %c0_i32, %arg1 : i32, i32
  }
  func.func @transform_2(%arg0: i32, %arg1: i32) -> (i32, i32) {
    %c2_i32 = arith.constant 2 : i32
    %0 = arith.addi %arg1, %c2_i32 : i32
    %c0_i32 = arith.constant 0 : i32
    %c0_i32_0 = arith.constant 0 : i32
    return %c0_i32, %0 : i32, i32
  }
  func.func @transform_3(%arg0: i32, %arg1: i32) -> (i32, i32) {
    %c0_i32 = arith.constant 0 : i32
    %c0_i32_0 = arith.constant 0 : i32
    return %arg1, %c0_i32 : i32, i32
  }
  func.func @transform_4(%arg0: i32, %arg1: i32) -> (i32, i32) {
    %c0_i32 = arith.constant 0 : i32
    %c0_i32_0 = arith.constant 0 : i32
    return %arg0, %c0_i32 : i32, i32
  }
}

</mosaic_0001>

<llo_original>
// kernel: tpu_custom_call.1
$region0: #{tpu_custom_call.1}
  #allocation0 [shape = 'u32[]', space=smem, size = 0x4, offset = 0x4, fixed_abs, tag = 'smem constant byte address 0x4 - core index']
  #allocation1 [shape = 'u32[144,128]{1,0:T(1,128)}', space=vmem, size = 0x12000, scoped, tag = 'internal scratch']
  #allocation2 [shape = 'f32[16,128]{1,0:T(8,128)}', space=vmem, size = 0x2000, scoped, tag = 'scratch operand']
  %s0 = inlined_call_operand.hbm [shape: f32[48,128], index: 0, kind: input, shape index: {}]
  %s1 = inlined_call_operand.hbm [shape: f32[128,512], index: 1, kind: input, shape index: {}]
  %s2 = inlined_call_operand.hbm [shape: f32[128,512], index: 2, kind: input, shape index: {}]
  %s3 = inlined_call_operand.hbm [shape: f32[256,128], index: 3, kind: input, shape index: {}]
  %s4 = inlined_call_operand.hbm [shape: f32[48,128], index: 4, kind: output, shape index: {}]
  %s5 = sld [smem:[#allocation0]]
  $region73: #{tpu_custom_call.1} parent=0
    _
  %s7 = ssub.s32 1, %s5
  %s8 = scalar_select 0, %s7, %s5
  $region1: #{tpu_custom_call.1} parent=0
    #allocation3 [shape = 'u8[16384]{0}', space=vmem, size = 0x4000, scoped, tag = 'input window, operand 0']
    #allocation4 [shape = 's32[2]{0}', space=sflag, size = 0x8, scoped, tag = 'scoped memory for tpu_custom_call.1']
    #allocation5 [shape = 's32[2]{0}', space=sflag, size = 0x8, scoped, tag = 'scoped memory for tpu_custom_call.1']
    #allocation6 [shape = 'u8[131072]{0}', space=vmem, size = 0x20000, scoped, tag = 'input window, operand 1']
    #allocation7 [shape = 's32[2]{0}', space=sflag, size = 0x8, scoped, tag = 'scoped memory for tpu_custom_call.1']
    #allocation8 [shape = 'u8[131072]{0}', space=vmem, size = 0x20000, scoped, tag = 'input window, operand 2']
    #allocation9 [shape = 'u8[131072]{0}', space=vmem, size = 0x20000, scoped, tag = 'input window, operand 3']
    #allocation10 [shape = 's32[2]{0}', space=sflag, size = 0x8, scoped, tag = 'scoped memory for tpu_custom_call.1']
    #allocation11 [shape = 'u8[16384]{0}', space=vmem, size = 0x4000, scoped, tag = 'output window, operand 0']
    %9 = vsyncpa [#allocation4], 0
    %s10 = scalar_lea.sflag [#allocation4], 1
    %11 = vsyncpa %s10, 0
    %12 = vsyncpa [#allocation7], 0
    %s13 = scalar_lea.sflag [#allocation7], 1
    %14 = vsyncpa %s13, 0
    %15 = vsyncpa [#allocation10], 0
    %s16 = scalar_lea.sflag [#allocation10], 1
    %17 = vsyncpa %s16, 0
    %18 = vsyncpa [#allocation5], 0
    %s19 = scalar_lea.sflag [#allocation5], 1
    %20 = vsyncpa %s19, 0
    loop: start=0, step=1, limit=8
    $region2: #{tpu_custom_call.1} parent=1 // loop_pre_header
      _
    $region3: #{tpu_custom_call.1} parent=1 // loop_header
      %s22 = sphi 0, %s26
      %p23 = scmp.ge.s32.totalorder %s22, 8
      %s29 = sphi 0, %s41
      %s30 = sphi 0, %s37
      %s31 = sphi 0, %s29
      %s32 = sphi 0, %s30
      %s33 = sphi 0, %s31
      %s34 = sphi 0, %s32
      %s44 = sphi 0, %s46
      %s47 = sphi 0, %s44
      %s48 = sphi 0, %s47
      %s64 = sphi 0, %s48
      %s70 = sphi 0, %s72
      %s73 = sphi 0, %s70
      %s74 = sphi 0, %s73
      %s90 = sphi 0, %s74
      %s98 = sphi 0, %s100
      %s101 = sphi 0, %s98
      %s102 = sphi 0, %s101
      %s118 = sphi 0, %s102
      %s124 = sphi 0, %s126
      %s127 = sphi 0, %s124
      %s128 = sphi 0, %s127
      %s144 = sphi 0, %s128
      %s150 = sphi 0, %s152
      %s153 = sphi 0, %s150
      %s154 = sphi 0, %s153
      %s170 = sphi 0, %s154
    $region4: #{tpu_custom_call.1} parent=1 // loop_header_branch
      %25 = sbr.rel (%p23) target = $region8
    $region5: #{tpu_custom_call.1} parent=1 // loop_body
      %s27 = ssub.s32 %s22, 1
      %s28 = ssub.s32 %s22, 2
      %s35 = sadd.s32 1, %s30
      %p36 = scmp.ge.s32.totalorder %s35, 2
      %s37 = scalar_select %p36, 0, %s35
      %s38 = sadd.s32 1, %s29
      %s39 = scalar_select %p36, %s38, %s29
      %p40 = scmp.ge.s32.totalorder %s39, 3
      %s41 = scalar_select %p40, 0, %s39
      %s42 = ssub.s32 %s29, %s41
      %p43 = scmp.eq.s32.totalorder %s42, 0
      %s45 = sadd.s32 %s44, 1
      %s46 = scalar_select %p43, %s44, %s45
      %p49 = pneg %p43
      %p50 = scmp.eq.s32.totalorder %s22, 5
      %p51 = por %p49, %p50
      %p52 = scmp.ne.s32.totalorder %s44, %s47
      %p53 = scmp.eq.s32.totalorder %s22, 0
      %p54 = por %p52, %p53
      %p55 = scmp.ne.s32.totalorder %s44, %s47
      %p56 = scmp.eq.s32.totalorder %s27, 5
      %p57 = por %p55, %p56
      %p58 = scmp.ne.s32.totalorder %s47, %s48
      %p59 = scmp.eq.s32.totalorder %s27, 0
      %p60 = por %p58, %p59
      %p61 = scmp.ne.s32.totalorder %s47, %s48
      %p62 = scmp.eq.s32.totalorder %s28, 5
      %p63 = por %p61, %p62
      %p65 = scmp.ne.s32.totalorder %s48, %s64
      %p66 = scmp.eq.s32.totalorder %s28, 0
      %p67 = por %p65, %p66
      %s68 = ssub.s32 %s30, %s37
      %p69 = scmp.eq.s32.totalorder %s68, 0
      %s71 = sadd.s32 %s70, 1
      %s72 = scalar_select %p69, %s70, %s71
      %p75 = pneg %p69
      %p76 = scmp.eq.s32.totalorder %s22, 5
      %p77 = por %p75, %p76
      %p78 = scmp.ne.s32.totalorder %s70, %s73
      %p79 = scmp.eq.s32.totalorder %s22, 0
      %p80 = por %p78, %p79
      %p81 = scmp.ne.s32.totalorder %s70, %s73
      %p82 = scmp.eq.s32.totalorder %s27, 5
      %p83 = por %p81, %p82
      %p84 = scmp.ne.s32.totalorder %s73, %s74
      %p85 = scmp.eq.s32.totalorder %s27, 0
      %p86 = por %p84, %p85
      %p87 = scmp.ne.s32.totalorder %s73, %s74
      %p88 = scmp.eq.s32.totalorder %s28, 5
      %p89 = por %p87, %p88
      %p91 = scmp.ne.s32.totalorder %s74, %s90
      %p92 = scmp.eq.s32.totalorder %s28, 0
      %p93 = por %p91, %p92
      %s94 = sadd.s32 %s30, 2
      %s95 = sadd.s32 %s37, 2
      %s96 = ssub.s32 %s94, %s95
      %p97 = scmp.eq.s32.totalorder %s96, 0
      %s99 = sadd.s32 %s98, 1
      %s100 = scalar_select %p97, %s98, %s99
      %p103 = pneg %p97
      %p104 = scmp.eq.s32.totalorder %s22, 5
      %p105 = por %p103, %p104
      %p106 = scmp.ne.s32.totalorder %s98, %s101
      %p107 = scmp.eq.s32.totalorder %s22, 0
      %p108 = por %p106, %p107
      %p109 = scmp.ne.s32.totalorder %s98, %s101
      %p110 = scmp.eq.s32.totalorder %s27, 5
      %p111 = por %p109, %p110
      %p112 = scmp.ne.s32.totalorder %s101, %s102
      %p113 = scmp.eq.s32.totalorder %s27, 0
      %p114 = por %p112, %p113
      %p115 = scmp.ne.s32.totalorder %s101, %s102
      %p116 = scmp.eq.s32.totalorder %s28, 5
      %p117 = por %p115, %p116
      %p119 = scmp.ne.s32.totalorder %s102, %s118
      %p120 = scmp.eq.s32.totalorder %s28, 0
      %p121 = por %p119, %p120
      %s122 = ssub.s32 %s30, %s37
      %p123 = scmp.eq.s32.totalorder %s122, 0
      %s125 = sadd.s32 %s124, 1
      %s126 = scalar_select %p123, %s124, %s125
      %p129 = pneg %p123
      %p130 = scmp.eq.s32.totalorder %s22, 5
      %p131 = por %p129, %p130
      %p132 = scmp.ne.s32.totalorder %s124, %s127
      %p133 = scmp.eq.s32.totalorder %s22, 0
      %p134 = por %p132, %p133
      %p135 = scmp.ne.s32.totalorder %s124, %s127
      %p136 = scmp.eq.s32.totalorder %s27, 5
      %p137 = por %p135, %p136
      %p138 = scmp.ne.s32.totalorder %s127, %s128
      %p139 = scmp.eq.s32.totalorder %s27, 0
      %p140 = por %p138, %p139
      %p141 = scmp.ne.s32.totalorder %s127, %s128
      %p142 = scmp.eq.s32.totalorder %s28, 5
      %p143 = por %p141, %p142
      %p145 = scmp.ne.s32.totalorder %s128, %s144
      %p146 = scmp.eq.s32.totalorder %s28, 0
      %p147 = por %p145, %p146
      %s148 = ssub.s32 %s29, %s41
      %p149 = scmp.eq.s32.totalorder %s148, 0
      %s151 = sadd.s32 %s150, 1
      %s152 = scalar_select %p149, %s150, %s151
      %p155 = pneg %p149
      %p156 = scmp.eq.s32.totalorder %s22, 5
      %p157 = por %p155, %p156
      %p158 = scmp.ne.s32.totalorder %s150, %s153
      %p159 = scmp.eq.s32.totalorder %s22, 0
      %p160 = por %p158, %p159
      %p161 = scmp.ne.s32.totalorder %s150, %s153
      %p162 = scmp.eq.s32.totalorder %s27, 5
      %p163 = por %p161, %p162
      %p164 = scmp.ne.s32.totalorder %s153, %s154
      %p165 = scmp.eq.s32.totalorder %s27, 0
      %p166 = por %p164, %p165
      %p167 = scmp.ne.s32.totalorder %s153, %s154
      %p168 = scmp.eq.s32.totalorder %s28, 5
      %p169 = por %p167, %p168
      %p171 = scmp.ne.s32.totalorder %s154, %s170
      %p172 = scmp.eq.s32.totalorder %s28, 0
      %p173 = por %p171, %p172
      %p174 = scmp.le.s32.totalorder 1, %s22
      %p175 = scmp.lt.s32.totalorder %s22, 7
      %p176 = pnand %p174, %p175
      %p177 = pneg %p176
      // Predicated region
      $region9: #{tpu_custom_call.1} parent=5 // pred_check
        _
      $region10: #{tpu_custom_call.1} parent=5 // pred_check_branch
        %179 = sbr.rel (%p176) target = $region12
      $region11: #{tpu_custom_call.1} parent=5 // pred_region
        %s180 = ssub.s32 %s22, 1
      $region12: #{tpu_custom_call.1} parent=5 // pred_fallthru
        _
      %p181 = scmp.lt.s32.totalorder %s22, 6
      // Predicated region
      $region13: #{tpu_custom_call.1} parent=5 // pred_check
        %p182 = pneg %p181
      $region14: #{tpu_custom_call.1} parent=5 // pred_check_branch
        %184 = sbr.rel (%p182) target = $region16
      $region15: #{tpu_custom_call.1} parent=5 // pred_region
        // Predicated region
        $region17: #{tpu_custom_call.1} parent=15 // pred_check
          %p185 = pneg %p54
        $region18: #{tpu_custom_call.1} parent=15 // pred_check_branch
          %187 = sbr.rel (%p185) target = $region20
        $region19: #{tpu_custom_call.1} parent=15 // pred_region
          %s188 = sand.u32 %s44, 1
          %s189 = scalar_lea.sflag [#allocation4], %s188
          %s190 = sand.u32 %s44, 1
          %s191 = smul.addr %s190, 16
          %s192 = scalar_lea.vmem [#allocation3], %s191
          %s193 = smul.u32 2, %s29
          %s195 = ssub.s32 256, 256
          %196 = vsyncadd %s189, %s195
          %s197 = smul.addr %s193, 128
          %s198 = scalar_lea.hbm %s0, %s197
          %s199 = sshll.u32 %s192, 4
          %s200 = int_to_ptr.vmem [resolvable:$true] %s199
          %205 = dma.hbm_to_vmem [thread:$0]  %s198, 256, %s200, %s189, 128, 128, 8
        $region20: #{tpu_custom_call.1} parent=15 // pred_fallthru
          _
        // Predicated region
        $region21: #{tpu_custom_call.1} parent=15 // pred_check
          %p206 = pneg %p80
        $region22: #{tpu_custom_call.1} parent=15 // pred_check_branch
          %208 = sbr.rel (%p206) target = $region24
        $region23: #{tpu_custom_call.1} parent=15 // pred_region
          %s209 = sand.u32 %s22, 1
          %s210 = scalar_lea.sflag [#allocation7], %s209
          %s211 = sand.u32 %s70, 1
          %s212 = smul.addr %s211, 128
          %s213 = scalar_lea.vmem [#allocation6], %s212
          %s215 = ssub.s32 2048, 2048
          %216 = vsyncadd %s210, %s215
          %s217 = smul.addr %s30, 128
          %s218 = scalar_lea.hbm %s1, %s217
          %s219 = sshll.u32 %s213, 4
          %s220 = int_to_ptr.vmem [resolvable:$true] %s219
          %225 = dma.hbm_to_vmem [thread:$0]  %s218, 2048, %s220, %s210, 512, 128, 8
        $region24: #{tpu_custom_call.1} parent=15 // pred_fallthru
          _
        // Predicated region
        $region25: #{tpu_custom_call.1} parent=15 // pred_check
          %p226 = pneg %p108
        $region26: #{tpu_custom_call.1} parent=15 // pred_check_branch
          %228 = sbr.rel (%p226) target = $region28
        $region27: #{tpu_custom_call.1} parent=15 // pred_region
          %s229 = sand.u32 %s22, 1
          %s230 = scalar_lea.sflag [#allocation7], %s229
          %s231 = sand.u32 %s98, 1
          %s232 = smul.addr %s231, 128
          %s233 = scalar_lea.vmem [#allocation8], %s232
          %s234 = sadd.s32 %s30, 2
          %s236 = ssub.s32 2048, 2048
          %237 = vsyncadd %s230, %s236
          %s238 = smul.addr %s234, 128
          %s239 = scalar_lea.hbm %s2, %s238
          %s240 = sshll.u32 %s233, 4
          %s241 = int_to_ptr.vmem [resolvable:$true] %s240
          %246 = dma.hbm_to_vmem [thread:$0]  %s239, 2048, %s241, %s230, 512, 128, 8
        $region28: #{tpu_custom_call.1} parent=15 // pred_fallthru
          _
        // Predicated region
        $region29: #{tpu_custom_call.1} parent=15 // pred_check
          %p247 = pneg %p134
        $region30: #{tpu_custom_call.1} parent=15 // pred_check_branch
          %249 = sbr.rel (%p247) target = $region32
        $region31: #{tpu_custom_call.1} parent=15 // pred_region
          %s250 = sand.u32 %s124, 1
          %s251 = scalar_lea.sflag [#allocation10], %s250
          %s252 = sand.u32 %s124, 1
          %s253 = smul.addr %s252, 128
          %s254 = scalar_lea.vmem [#allocation9], %s253
          %s255 = smul.u32 16, %s30
          %s257 = ssub.s32 2048, 2048
          %258 = vsyncadd %s251, %s257
          %s259 = smul.addr %s255, 128
          %s260 = scalar_lea.hbm %s3, %s259
          %s261 = sshll.u32 %s254, 4
          %s262 = int_to_ptr.vmem [resolvable:$true] %s261
          %267 = dma.hbm_to_vmem [thread:$0]  %s260, 2048, %s262, %s251, 128, 128, 8
        $region32: #{tpu_custom_call.1} parent=15 // pred_fallthru
          _
      $region16: #{tpu_custom_call.1} parent=5 // pred_fallthru
        _
      %p268 = scmp.le.s32.totalorder 1, %s22
      %p269 = scmp.lt.s32.totalorder %s22, 7
      %p270 = pnand %p268, %p269
      %p271 = pneg %p270
      // Predicated region
      $region33: #{tpu_custom_call.1} parent=5 // pred_check
        _
      $region34: #{tpu_custom_call.1} parent=5 // pred_check_branch
        %273 = sbr.rel (%p270) target = $region36
      $region35: #{tpu_custom_call.1} parent=5 // pred_region
        %s274 = ssub.s32 %s22, 1
        %s275 = sand.u32 %s47, 1
        %s276 = scalar_lea.sflag [#allocation4], %s275
        %s277 = sand.u32 %s47, 1
        %s278 = smul.addr %s277, 16
        %s279 = scalar_lea.vmem [#allocation3], %s278
        // Predicated region
        $region37: #{tpu_custom_call.1} parent=35 // pred_check
          %p280 = pneg %p60
        $region38: #{tpu_custom_call.1} parent=35 // pred_check_branch
          %282 = sbr.rel (%p280) target = $region40
        $region39: #{tpu_custom_call.1} parent=35 // pred_region
          %283 = dma.done %s276, 256
        $region40: #{tpu_custom_call.1} parent=35 // pred_fallthru
          _
        %s284 = sand.u32 %s27, 1
        %s285 = scalar_lea.sflag [#allocation7], %s284
        %s286 = sand.u32 %s73, 1
        %s287 = smul.addr %s286, 128
        %s288 = scalar_lea.vmem [#allocation6], %s287
        // Predicated region
        $region41: #{tpu_custom_call.1} parent=35 // pred_check
          %p289 = pneg %p86
        $region42: #{tpu_custom_call.1} parent=35 // pred_check_branch
          %291 = sbr.rel (%p289) target = $region44
        $region43: #{tpu_custom_call.1} parent=35 // pred_region
          %292 = dma.done %s285, 2048
        $region44: #{tpu_custom_call.1} parent=35 // pred_fallthru
          _
        %s293 = sand.u32 %s27, 1
        %s294 = scalar_lea.sflag [#allocation7], %s293
        %s295 = sand.u32 %s101, 1
        %s296 = smul.addr %s295, 128
        %s297 = scalar_lea.vmem [#allocation8], %s296
        // Predicated region
        $region45: #{tpu_custom_call.1} parent=35 // pred_check
          %p298 = pneg %p114
        $region46: #{tpu_custom_call.1} parent=35 // pred_check_branch
          %300 = sbr.rel (%p298) target = $region48
        $region47: #{tpu_custom_call.1} parent=35 // pred_region
          %301 = dma.done %s294, 2048
        $region48: #{tpu_custom_call.1} parent=35 // pred_fallthru
          _
        %s302 = sand.u32 %s127, 1
        %s303 = scalar_lea.sflag [#allocation10], %s302
        %s304 = sand.u32 %s127, 1
        %s305 = smul.addr %s304, 128
        %s306 = scalar_lea.vmem [#allocation9], %s305
        // Predicated region
        $region49: #{tpu_custom_call.1} parent=35 // pred_check
          %p307 = pneg %p140
        $region50: #{tpu_custom_call.1} parent=35 // pred_check_branch
          %309 = sbr.rel (%p307) target = $region52
        $region51: #{tpu_custom_call.1} parent=35 // pred_region
          %310 = dma.done %s303, 2048
        $region52: #{tpu_custom_call.1} parent=35 // pred_fallthru
          _
        %s311 = sand.u32 %s47, 1
        %s312 = scalar_lea.sflag [#allocation4], %s311
        %s313 = sand.u32 %s47, 1
        %s314 = smul.addr %s313, 16
        %s315 = scalar_lea.vmem [#allocation3], %s314
        %p316 = pneg %p60
        %p317 = pneg %p57
        %s318 = sand.u32 %s27, 1
        %s319 = scalar_lea.sflag [#allocation7], %s318
        %s320 = sand.u32 %s73, 1
        %s321 = smul.addr %s320, 128
        %s322 = scalar_lea.vmem [#allocation6], %s321
        %p323 = pneg %p86
        %p324 = pneg %p83
        %s325 = sand.u32 %s27, 1
        %s326 = scalar_lea.sflag [#allocation7], %s325
        %s327 = sand.u32 %s101, 1
        %s328 = smul.addr %s327, 128
        %s329 = scalar_lea.vmem [#allocation8], %s328
        %p330 = pneg %p114
        %p331 = pneg %p111
        %s332 = sand.u32 %s127, 1
        %s333 = scalar_lea.sflag [#allocation10], %s332
        %s334 = sand.u32 %s127, 1
        %s335 = smul.addr %s334, 128
        %s336 = scalar_lea.vmem [#allocation9], %s335
        %p337 = pneg %p140
        %p338 = pneg %p137
        %p339 = pneg %p166
        %p340 = pneg %p163
        %s341 = sand.u32 %s153, 1
        %s342 = scalar_lea.sflag [#allocation5], %s341
        %s343 = sand.u32 %s153, 1
        %s344 = smul.addr %s343, 16
        %s345 = scalar_lea.vmem [#allocation11], %s344
        %s346 = smul.u32 2, %s31
        %s347 = sadd.s32 %s32, 2
        %s348 = smul.u32 16, %s32
        %s349 = smul.u32 2, %s31
        %p350 = scmp.eq.s32.totalorder %s32, 0
        // Predicated region
        $region53: #{tpu_custom_call.1} parent=35 // pred_check
          %p351 = pneg %p350
        $region54: #{tpu_custom_call.1} parent=35 // pred_check_branch
          %353 = sbr.rel (%p351) target = $region56
        $region55: #{tpu_custom_call.1} parent=35 // pred_region
          %354 = vst [vmem:[#allocation2] sm:$0xff] 0.0
          %355 = vst [vmem:[#allocation2 + $0x8] sm:$0xff] 0.0
        $region56: #{tpu_custom_call.1} parent=35 // pred_fallthru
          _
        %v356 = vld [vmem:[%s279] sm:$0xff]
        %v357 = vld [vmem:[%s279 + $0x8] sm:$0xff]
        %v358 = vld [vmem:[%s288] sm:$0xff]
        %v359 = vld [vmem:[%s288 + $0x8] sm:$0xff]
        %v360 = vld [vmem:[%s288 + $0x10] sm:$0xff]
        %v361 = vld [vmem:[%s288 + $0x18] sm:$0xff]
        %v362 = vld [vmem:[%s288 + $0x20] sm:$0xff]
        %v363 = vld [vmem:[%s288 + $0x28] sm:$0xff]
        %v364 = vld [vmem:[%s288 + $0x30] sm:$0xff]
        %v365 = vld [vmem:[%s288 + $0x38] sm:$0xff]
        %v366 = vld [vmem:[%s288 + $0x40] sm:$0xff]
        %v367 = vld [vmem:[%s288 + $0x48] sm:$0xff]
        %v368 = vld [vmem:[%s288 + $0x50] sm:$0xff]
        %v369 = vld [vmem:[%s288 + $0x58] sm:$0xff]
        %v370 = vld [vmem:[%s288 + $0x60] sm:$0xff]
        %v371 = vld [vmem:[%s288 + $0x68] sm:$0xff]
        %v372 = vld [vmem:[%s288 + $0x70] sm:$0xff]
        %v373 = vld [vmem:[%s288 + $0x78] sm:$0xff]
        %374 = vmatprep.subr.mxu0 0.0
        %375 = vmatpush1.msra.mxu0 %v358
        %376 = vmatprep.subr.mxu0 0.0
        %377 = vmatpush1.msra.mxu0 %v359
        %378 = vmatprep.subr.mxu0 0.0
        %379 = vmatpush1.msra.mxu0 %v360
        %380 = vmatprep.subr.mxu0 0.0
        %381 = vmatpush1.msra.mxu0 %v361
        %382 = vmatprep.subr.mxu0 0.0
        %383 = vmatpush1.msra.mxu0 %v362
        %384 = vmatprep.subr.mxu0 0.0
        %385 = vmatpush1.msra.mxu0 %v363
        %386 = vmatprep.subr.mxu0 0.0
        %387 = vmatpush1.msra.mxu0 %v364
        %388 = vmatprep.subr.mxu0 0.0
        %389 = vmatpush1.msra.mxu0 %v365
        %390 = vmatprep.subr.mxu0 0.0
        %391 = vmatpush1.msra.mxu0 %v366
        %392 = vmatprep.subr.mxu0 0.0
        %393 = vmatpush1.msra.mxu0 %v367
        %394 = vmatprep.subr.mxu0 0.0
        %395 = vmatpush1.msra.mxu0 %v368
        %396 = vmatprep.subr.mxu0 0.0
        %397 = vmatpush1.msra.mxu0 %v369
        %398 = vmatprep.subr.mxu0 0.0
        %399 = vmatpush1.msra.mxu0 %v370
        %400 = vmatprep.subr.mxu0 0.0
        %401 = vmatpush1.msra.mxu0 %v371
        %402 = vmatprep.subr.mxu0 0.0
        %403 = vmatpush1.msra.mxu0 %v372
        %404 = vmatprep.subr.mxu0 0.0
        %405 = vmatpush1.msra.mxu0 %v373
        %406 = vmatprep.subr.mxu0 0.0
        %407 = vmatpush1.msra.mxu0 0.0
        %408 = vmatprep.subr.mxu0 0.0
        %409 = vmatpush1.msra.mxu0 0.0
        %410 = vmatprep.subr.mxu0 0.0
        %411 = vmatpush1.msra.mxu0 0.0
        %412 = vmatprep.subr.mxu0 0.0
        %413 = vmatpush1.msra.mxu0 0.0
        %414 = vmatprep.subr.mxu0 0.0
        %415 = vmatpush1.msra.mxu0 0.0
        %416 = vmatprep.subr.mxu0 0.0
        %417 = vmatpush1.msra.mxu0 0.0
        %418 = vmatprep.subr.mxu0 0.0
        %419 = vmatpush1.msra.mxu0 0.0
        %420 = vmatprep.subr.mxu0 0.0
        %421 = vmatpush1.msra.mxu0 0.0
        %422 = vmatprep.subr.mxu0 0.0
        %423 = vmatpush1.msra.mxu0 0.0
        %424 = vmatprep.subr.mxu0 0.0
        %425 = vmatpush1.msra.mxu0 0.0
        %426 = vmatprep.subr.mxu0 0.0
        %427 = vmatpush1.msra.mxu0 0.0
        %428 = vmatprep.subr.mxu0 0.0
        %429 = vmatpush1.msra.mxu0 0.0
        %430 = vmatprep.subr.mxu0 0.0
        %431 = vmatpush1.msra.mxu0 0.0
        %432 = vmatprep.subr.mxu0 0.0
        %433 = vmatpush1.msra.mxu0 0.0
        %434 = vmatprep.subr.mxu0 0.0
        %435 = vmatpush1.msra.mxu0 0.0
        %436 = vmatprep.subr.mxu0 0.0
        %437 = vmatpush1.msra.mxu0 0.0
        %438 = vmatprep.mubr.f32.mxu0 0.0
        %439 = vmatmul.mubr.f32.gmra.mrb[0].mxu0 %v356
        %v440 = vpop.f32.mrb[0].mxu0
        %v441 = vadd.f32 0.0, %v440
        %v442 = vpop.f32.mrb[0].mxu0
        %443 = vmatprep.mubr.f32.mxu0 0.0
        %444 = vmatmul.mubr.f32.gmra.mrb[0].mxu0 %v357
        %v445 = vpop.f32.mrb[0].mxu0
        %v446 = vadd.f32 0.0, %v445
        %v447 = vpop.f32.mrb[0].mxu0
        %448 = vdwg.mxu0
        %v449 = vld [vmem:[%s297] sm:$0xff]
        %v450 = vld [vmem:[%s297 + $0x8] sm:$0xff]
        %v451 = vld [vmem:[%s297 + $0x10] sm:$0xff]
        %v452 = vld [vmem:[%s297 + $0x18] sm:$0xff]
        %v453 = vld [vmem:[%s297 + $0x20] sm:$0xff]
        %v454 = vld [vmem:[%s297 + $0x28] sm:$0xff]
        %v455 = vld [vmem:[%s297 + $0x30] sm:$0xff]
        %v456 = vld [vmem:[%s297 + $0x38] sm:$0xff]
        %v457 = vld [vmem:[%s297 + $0x40] sm:$0xff]
        %v458 = vld [vmem:[%s297 + $0x48] sm:$0xff]
        %v459 = vld [vmem:[%s297 + $0x50] sm:$0xff]
        %v460 = vld [vmem:[%s297 + $0x58] sm:$0xff]
        %v461 = vld [vmem:[%s297 + $0x60] sm:$0xff]
        %v462 = vld [vmem:[%s297 + $0x68] sm:$0xff]
        %v463 = vld [vmem:[%s297 + $0x70] sm:$0xff]
        %v464 = vld [vmem:[%s297 + $0x78] sm:$0xff]
        %465 = vmatprep.subr.mxu0 0.0
        %466 = vmatpush1.msra.mxu0 %v449
        %467 = vmatprep.subr.mxu0 0.0
        %468 = vmatpush1.msra.mxu0 %v450
        %469 = vmatprep.subr.mxu0 0.0
        %470 = vmatpush1.msra.mxu0 %v451
        %471 = vmatprep.subr.mxu0 0.0
        %472 = vmatpush1.msra.mxu0 %v452
        %473 = vmatprep.subr.mxu0 0.0
        %474 = vmatpush1.msra.mxu0 %v453
        %475 = vmatprep.subr.mxu0 0.0
        %476 = vmatpush1.msra.mxu0 %v454
        %477 = vmatprep.subr.mxu0 0.0
        %478 = vmatpush1.msra.mxu0 %v455
        %479 = vmatprep.subr.mxu0 0.0
        %480 = vmatpush1.msra.mxu0 %v456
        %481 = vmatprep.subr.mxu0 0.0
        %482 = vmatpush1.msra.mxu0 %v457
        %483 = vmatprep.subr.mxu0 0.0
        %484 = vmatpush1.msra.mxu0 %v458
        %485 = vmatprep.subr.mxu0 0.0
        %486 = vmatpush1.msra.mxu0 %v459
        %487 = vmatprep.subr.mxu0 0.0
        %488 = vmatpush1.msra.mxu0 %v460
        %489 = vmatprep.subr.mxu0 0.0
        %490 = vmatpush1.msra.mxu0 %v461
        %491 = vmatprep.subr.mxu0 0.0
        %492 = vmatpush1.msra.mxu0 %v462
        %493 = vmatprep.subr.mxu0 0.0
        %494 = vmatpush1.msra.mxu0 %v463
        %495 = vmatprep.subr.mxu0 0.0
        %496 = vmatpush1.msra.mxu0 %v464
        %497 = vmatprep.subr.mxu0 0.0
        %498 = vmatpush1.msra.mxu0 0.0
        %499 = vmatprep.subr.mxu0 0.0
        %500 = vmatpush1.msra.mxu0 0.0
        %501 = vmatprep.subr.mxu0 0.0
        %502 = vmatpush1.msra.mxu0 0.0
        %503 = vmatprep.subr.mxu0 0.0
        %504 = vmatpush1.msra.mxu0 0.0
        %505 = vmatprep.subr.mxu0 0.0
        %506 = vmatpush1.msra.mxu0 0.0
        %507 = vmatprep.subr.mxu0 0.0
        %508 = vmatpush1.msra.mxu0 0.0
        %509 = vmatprep.subr.mxu0 0.0
        %510 = vmatpush1.msra.mxu0 0.0
        %511 = vmatprep.subr.mxu0 0.0
        %512 = vmatpush1.msra.mxu0 0.0
        %513 = vmatprep.subr.mxu0 0.0
        %514 = vmatpush1.msra.mxu0 0.0
        %515 = vmatprep.subr.mxu0 0.0
        %516 = vmatpush1.msra.mxu0 0.0
        %517 = vmatprep.subr.mxu0 0.0
        %518 = vmatpush1.msra.mxu0 0.0
        %519 = vmatprep.subr.mxu0 0.0
        %520 = vmatpush1.msra.mxu0 0.0
        %521 = vmatprep.subr.mxu0 0.0
        %522 = vmatpush1.msra.mxu0 0.0
        %523 = vmatprep.subr.mxu0 0.0
        %524 = vmatpush1.msra.mxu0 0.0
        %525 = vmatprep.subr.mxu0 0.0
        %526 = vmatpush1.msra.mxu0 0.0
        %527 = vmatprep.subr.mxu0 0.0
        %528 = vmatpush1.msra.mxu0 0.0
        %529 = vmatprep.mubr.f32.mxu0 0.0
        %530 = vmatmul.mubr.f32.gmra.mrb[0].mxu0 %v356
        %v531 = vpop.f32.mrb[0].mxu0
        %v532 = vadd.f32 0.0, %v531
        %v533 = vpop.f32.mrb[0].mxu0
        %534 = vmatprep.mubr.f32.mxu0 0.0
        %535 = vmatmul.mubr.f32.gmra.mrb[0].mxu0 %v357
        %v536 = vpop.f32.mrb[0].mxu0
        %v537 = vadd.f32 0.0, %v536
        %v538 = vpop.f32.mrb[0].mxu0
        %539 = vdwg.mxu0
        %v540 = vxor.u32 %v441, 2147483648
        %v541 = vxor.u32 %v446, 2147483648
        %v542 = vmul.f32 %v540, 1.442695
        %v543 = vpow.pop %v542
        %v544 = vmul.f32 %v541, 1.442695
        %v545 = vpow.pop %v544
        %v546 = vadd.f32 %v543, 1.0
        %v547 = vadd.f32 %v545, 1.0
        %v548 = vrcp.pop %v546
        %v549 = vmul.f32 1.0, %v548
        %v550 = vrcp.pop %v547
        %v551 = vmul.f32 1.0, %v550
        %v552 = vmul.f32 %v441, %v549
        %v553 = vmul.f32 %v446, %v551
        %v554 = vmul.f32 %v552, %v532
        %v555 = vmul.f32 %v553, %v537
        %v556 = vld [vmem:[#allocation2] sm:$0xff]
        %v557 = vld [vmem:[#allocation2 + $0x8] sm:$0xff]
        %v558 = vld [vmem:[%s306] sm:$0xff]
        %v559 = vld [vmem:[%s306 + $0x8] sm:$0xff]
        %v560 = vld [vmem:[%s306 + $0x10] sm:$0xff]
        %v561 = vld [vmem:[%s306 + $0x18] sm:$0xff]
        %v562 = vld [vmem:[%s306 + $0x20] sm:$0xff]
        %v563 = vld [vmem:[%s306 + $0x28] sm:$0xff]
        %v564 = vld [vmem:[%s306 + $0x30] sm:$0xff]
        %v565 = vld [vmem:[%s306 + $0x38] sm:$0xff]
        %v566 = vld [vmem:[%s306 + $0x40] sm:$0xff]
        %v567 = vld [vmem:[%s306 + $0x48] sm:$0xff]
        %v568 = vld [vmem:[%s306 + $0x50] sm:$0xff]
        %v569 = vld [vmem:[%s306 + $0x58] sm:$0xff]
        %v570 = vld [vmem:[%s306 + $0x60] sm:$0xff]
        %v571 = vld [vmem:[%s306 + $0x68] sm:$0xff]
        %v572 = vld [vmem:[%s306 + $0x70] sm:$0xff]
        %v573 = vld [vmem:[%s306 + $0x78] sm:$0xff]
        %574 = vmatprep.subr.mxu0 0.0
        %575 = vmatpush1.msra.mxu0 %v558
        %576 = vmatprep.subr.mxu0 0.0
        %577 = vmatpush1.msra.mxu0 %v559
        %578 = vmatprep.subr.mxu0 0.0
        %579 = vmatpush1.msra.mxu0 %v560
        %580 = vmatprep.subr.mxu0 0.0
        %581 = vmatpush1.msra.mxu0 %v561
        %582 = vmatprep.subr.mxu0 0.0
        %583 = vmatpush1.msra.mxu0 %v562
        %584 = vmatprep.subr.mxu0 0.0
        %585 = vmatpush1.msra.mxu0 %v563
        %586 = vmatprep.subr.mxu0 0.0
        %587 = vmatpush1.msra.mxu0 %v564
        %588 = vmatprep.subr.mxu0 0.0
        %589 = vmatpush1.msra.mxu0 %v565
        %590 = vmatprep.subr.mxu0 0.0
        %591 = vmatpush1.msra.mxu0 %v566
        %592 = vmatprep.subr.mxu0 0.0
        %593 = vmatpush1.msra.mxu0 %v567
        %594 = vmatprep.subr.mxu0 0.0
        %595 = vmatpush1.msra.mxu0 %v568
        %596 = vmatprep.subr.mxu0 0.0
        %597 = vmatpush1.msra.mxu0 %v569
        %598 = vmatprep.subr.mxu0 0.0
        %599 = vmatpush1.msra.mxu0 %v570
        %600 = vmatprep.subr.mxu0 0.0
        %601 = vmatpush1.msra.mxu0 %v571
        %602 = vmatprep.subr.mxu0 0.0
        %603 = vmatpush1.msra.mxu0 %v572
        %604 = vmatprep.subr.mxu0 0.0
        %605 = vmatpush1.msra.mxu0 %v573
        %606 = vmatprep.subr.mxu0 0.0
        %607 = vmatpush1.msra.mxu0 0.0
        %608 = vmatprep.subr.mxu0 0.0
        %609 = vmatpush1.msra.mxu0 0.0
        %610 = vmatprep.subr.mxu0 0.0
        %611 = vmatpush1.msra.mxu0 0.0
        %612 = vmatprep.subr.mxu0 0.0
        %613 = vmatpush1.msra.mxu0 0.0
        %614 = vmatprep.subr.mxu0 0.0
        %615 = vmatpush1.msra.mxu0 0.0
        %616 = vmatprep.subr.mxu0 0.0
        %617 = vmatpush1.msra.mxu0 0.0
        %618 = vmatprep.subr.mxu0 0.0
        %619 = vmatpush1.msra.mxu0 0.0
        %620 = vmatprep.subr.mxu0 0.0
        %621 = vmatpush1.msra.mxu0 0.0
        %622 = vmatprep.subr.mxu0 0.0
        %623 = vmatpush1.msra.mxu0 0.0
        %624 = vmatprep.subr.mxu0 0.0
        %625 = vmatpush1.msra.mxu0 0.0
        %626 = vmatprep.subr.mxu0 0.0
        %627 = vmatpush1.msra.mxu0 0.0
        %628 = vmatprep.subr.mxu0 0.0
        %629 = vmatpush1.msra.mxu0 0.0
        %630 = vmatprep.subr.mxu0 0.0
        %631 = vmatpush1.msra.mxu0 0.0
        %632 = vmatprep.subr.mxu0 0.0
        %633 = vmatpush1.msra.mxu0 0.0
        %634 = vmatprep.subr.mxu0 0.0
        %635 = vmatpush1.msra.mxu0 0.0
        %636 = vmatprep.subr.mxu0 0.0
        %637 = vmatpush1.msra.mxu0 0.0
        %638 = vmatprep.mubr.f32.mxu0 0.0
        %639 = vmatmul.mubr.f32.gmra.mrb[0].mxu0 %v554
        %v640 = vpop.f32.mrb[0].mxu0
        %v641 = vadd.f32 0.0, %v640
        %v642 = vpop.f32.mrb[0].mxu0
        %643 = vmatprep.mubr.f32.mxu0 0.0
        %644 = vmatmul.mubr.f32.gmra.mrb[0].mxu0 %v555
        %v645 = vpop.f32.mrb[0].mxu0
        %v646 = vadd.f32 0.0, %v645
        %v647 = vpop.f32.mrb[0].mxu0
        %648 = vdwg.mxu0
        %v649 = vadd.f32 %v556, %v641
        %v650 = vadd.f32 %v557, %v646
        %651 = vst [vmem:[#allocation2] sm:$0xff] %v649
        %652 = vst [vmem:[#allocation2 + $0x8] sm:$0xff] %v650
        %p653 = scmp.eq.s32.totalorder %s32, 1
        // Predicated region
        $region57: #{tpu_custom_call.1} parent=35 // pred_check
          %p654 = pneg %p653
        $region58: #{tpu_custom_call.1} parent=35 // pred_check_branch
          %656 = sbr.rel (%p654) target = $region60
        $region59: #{tpu_custom_call.1} parent=35 // pred_region
          %v657 = vld [vmem:[#allocation2] sm:$0xff]
          %v658 = vld [vmem:[#allocation2 + $0x8] sm:$0xff]
          %659 = vst [vmem:[%s345] sm:$0xff] %v657
          %660 = vst [vmem:[%s345 + $0x8] sm:$0xff] %v658
        $region60: #{tpu_custom_call.1} parent=35 // pred_fallthru
          _
        %s661 = sand.u32 %s153, 1
        %s662 = scalar_lea.sflag [#allocation5], %s661
        %s663 = sand.u32 %s153, 1
        %s664 = smul.addr %s663, 16
        %s665 = scalar_lea.vmem [#allocation11], %s664
        // Predicated region
        $region61: #{tpu_custom_call.1} parent=35 // pred_check
          %p666 = pneg %p163
        $region62: #{tpu_custom_call.1} parent=35 // pred_check_branch
          %668 = sbr.rel (%p666) target = $region64
        $region63: #{tpu_custom_call.1} parent=35 // pred_region
          %s669 = smul.u32 2, %s31
          %s671 = ssub.s32 256, 256
          %672 = vsyncadd %s662, %s671
          %s673 = smul.addr %s669, 128
          %s674 = scalar_lea.hbm %s4, %s673
          %s675 = sshll.u32 %s665, 4
          %s676 = int_to_ptr.vmem [resolvable:$true] %s675
          %681 = dma.vmem_to_hbm [thread:$0]  %s676, 256, %s674, %s662, 128, 128, 8
        $region64: #{tpu_custom_call.1} parent=35 // pred_fallthru
          _
      $region36: #{tpu_custom_call.1} parent=5 // pred_fallthru
        _
      %p682 = scmp.le.s32.totalorder 2, %s22
      // Predicated region
      $region65: #{tpu_custom_call.1} parent=5 // pred_check
        %p683 = pneg %p682
      $region66: #{tpu_custom_call.1} parent=5 // pred_check_branch
        %685 = sbr.rel (%p683) target = $region68
      $region67: #{tpu_custom_call.1} parent=5 // pred_region
        %s686 = ssub.s32 %s22, 2
        // Predicated region
        $region69: #{tpu_custom_call.1} parent=67 // pred_check
          %p687 = pneg %p169
        $region70: #{tpu_custom_call.1} parent=67 // pred_check_branch
          %689 = sbr.rel (%p687) target = $region72
        $region71: #{tpu_custom_call.1} parent=67 // pred_region
          %s690 = sand.u32 %s154, 1
          %s691 = scalar_lea.sflag [#allocation5], %s690
          %s692 = sand.u32 %s154, 1
          %s693 = smul.addr %s692, 16
          %s694 = scalar_lea.vmem [#allocation11], %s693
          %695 = dma.done %s691, 256
        $region72: #{tpu_custom_call.1} parent=67 // pred_fallthru
          _
      $region68: #{tpu_custom_call.1} parent=5 // pred_fallthru
        _
    $region6: #{tpu_custom_call.1} parent=1 // loop_footer
      %s26 = sadd.s32 1, %s22
    $region7: #{tpu_custom_call.1} parent=1 // loop_footer_branch
      %21 = sbr.rel target = $region3
    $region8: #{tpu_custom_call.1} parent=1 // loop_exit
      _
    %696 = vsyncpa [#allocation4], 1
    %s697 = scalar_lea.sflag [#allocation4], 1
    %698 = vsyncpa %s697, 1
    %699 = vsyncpa [#allocation7], 1
    %s700 = scalar_lea.sflag [#allocation7], 1
    %701 = vsyncpa %s700, 1
    %702 = vsyncpa [#allocation10], 1
    %s703 = scalar_lea.sflag [#allocation10], 1
    %704 = vsyncpa %s703, 1
    %705 = vsyncpa [#allocation5], 1
    %s706 = scalar_lea.sflag [#allocation5], 1
    %707 = vsyncpa %s706, 1

</llo_original>
